<compile_context>
chip_gen: v7x
topology: tpu7x:2x2x1
jax: 0.10.0
libtpu: 0.0.40
codegen_flags: <defaults>
</compile_context>

<pallas_src>
import numpy as np
import jax
import jax.numpy as jnp
from jax import lax
from jax.experimental import pallas as pl
from jax.experimental.pallas import tpu as pltpu

# ---------------------------------------------------------------------------
# Deterministic "cfg" constants (shapes taken from the module __init__)
# ---------------------------------------------------------------------------
CFG = dict(
    BBOX_NORMALIZE_MEANS=(0.0, 0.0, 0.0, 0.0),
    BBOX_NORMALIZE_STDS=(0.1, 0.1, 0.2, 0.2),
    DIM_NORMALIZE_MEANS=(3.88, 1.53, 1.63, 0.0, 0.0),
    DIM_NORMALIZE_STDS=(0.43, 0.14, 0.10, 1.0, 1.0),
    BBOX_INSIDE_WEIGHTS=(1.0, 1.0, 1.0, 1.0),
    FG_THRESH=0.5,
    BG_THRESH_HI=0.5,
    BG_THRESH_LO=0.0,
    BATCH_SIZE=16,        # TRAIN.BATCH_SIZE  (rois per image)
    FG_FRACTION=0.25,
    KPTS_GRID=28,
    BBOX_NORMALIZE_TARGETS_PRECOMPUTED=True,
    DIM_NORMALIZE_TARGETS_PRECOMPUTED=True,
)

# Compile-time constants baked into kernel 2 (no constant-tensor inputs,
# divides folded into reciprocal multiplies).
_BM = tuple(float(v) for v in CFG["BBOX_NORMALIZE_MEANS"])
_BS_INV = tuple(1.0 / float(v) for v in CFG["BBOX_NORMALIZE_STDS"])
_DM = tuple(float(v) for v in CFG["DIM_NORMALIZE_MEANS"])
_DS_INV = tuple(1.0 / float(v) for v in CFG["DIM_NORMALIZE_STDS"])
_BIW = tuple(float(v) for v in CFG["BBOX_INSIDE_WEIGHTS"])

# Packed slab row layout for kernel 2 (feature-major, R on lanes).
_ROW_ROIS_L = 0     # 0:4   left  sampled rois   (x1, y1, x2, y2)
_ROW_GT_L = 4       # 4:8   left  matched gt box
_ROW_ROIS_R = 8     # 8:12  right sampled rois
_ROW_GT_R = 12      # 12:16 right matched gt box
_ROW_DIM = 16       # 16:21 matched gt dim / orientation (5)
_ROW_KPTS = 21      # 21:27 matched gt keypoints (6)
_ROW_LABEL = 27     # 27    label
_F_IN = 28

# Output slab rows: 0:4 bt_l | 4:8 bt_r | 8:12 biw | 12:16 bow |
#                   16:21 dim_t | 21:24 kpts_t | 24:27 kpts_w
_F_OUT = 27

# Real per-step VMEM footprint is well under 1 MiB; this documents the budget
# and stays safely inside v5e/v6e (128 MiB) and v7x (64 MiB).
_VMEM_LIMIT_BYTES = 8 * 1024 * 1024


# ---------------------------------------------------------------------------
# Kernel 1: bbox_overlaps_batch + max/argmax  (N on lanes, K on sublanes)
# ---------------------------------------------------------------------------
def _iou_argmax_kernel(rois_l_ref, rois_r_ref, gt_l_ref, gt_r_ref,
                       max_l_ref, arg_l_ref, max_r_ref, arg_r_ref):
    # rois_*_ref : (4, N)  rows = x1, y1, x2, y2   (N proposals on lanes)
    # gt_*_ref   : (K, 4)  K gt boxes on sublanes
    # outputs    : (1, N)  lane-dense
    def one(rois_ref, gt_ref, max_ref, arg_ref):
        bx1 = rois_ref[0:1, :]
        by1 = rois_ref[1:2, :]
        bx2 = rois_ref[2:3, :]
        by2 = rois_ref[3:4, :]
        an_w = bx2 - bx1 + 1.0                       # (1, N)
        an_h = by2 - by1 + 1.0
        an_area = an_w * an_h
        an_zero = jnp.logical_and(an_w == 1.0, an_h == 1.0)

        gt = gt_ref[...]                             # (K, 4)
        qx1 = gt[:, 0:1]
        qy1 = gt[:, 1:2]
        qx2 = gt[:, 2:3]
        qy2 = gt[:, 3:4]
        gt_w = qx2 - qx1 + 1.0                       # (K, 1)
        gt_h = qy2 - qy1 + 1.0
        gt_area = gt_w * gt_h
        gt_zero = jnp.logical_and(gt_w == 1.0, gt_h == 1.0)

        iw = jnp.maximum(jnp.minimum(bx2, qx2) - jnp.maximum(bx1, qx1) + 1.0, 0.0)
        ih = jnp.maximum(jnp.minimum(by2, qy2) - jnp.maximum(by1, qy1) + 1.0, 0.0)
        inter = iw * ih                              # (K, N)
        ua = an_area + gt_area - inter
        ov = inter / ua
        ov = jnp.where(gt_zero, 0.0, ov)             # gt all-zero boxes -> 0
        ov = jnp.where(an_zero, -1.0, ov)            # anchor all-zero -> -1

        mx = jnp.max(ov, axis=0, keepdims=True)      # (1, N)  sublane reduce
        k = ov.shape[0]
        iota = lax.broadcasted_iota(jnp.int32, ov.shape, 0)
        arg = jnp.min(jnp.where(ov == mx, iota, k), axis=0, keepdims=True)
        max_ref[...] = mx
        arg_ref[...] = arg.astype(jnp.int32)

    one(rois_l_ref, gt_l_ref, max_l_ref, arg_l_ref)
    one(rois_r_ref, gt_r_ref, max_r_ref, arg_r_ref)


def iou_max_argmax(rois_l_t, rois_r_t, gt_l4, gt_r4):
    """rois_*_t: (B, 4, N) f32; gt_*4: (B, K, 4) f32  ->  4x (B, 1, N)."""
    B, _, N = rois_l_t.shape
    K = gt_l4.shape[1]
    roi_spec = pl.BlockSpec((None, 4, N), lambda b: (b, 0, 0))
    gt_spec = pl.BlockSpec((None, K, 4), lambda b: (b, 0, 0))
    out_spec = pl.BlockSpec((None, 1, N), lambda b: (b, 0, 0))
    out_shape = (
        jax.ShapeDtypeStruct((B, 1, N), jnp.float32),
        jax.ShapeDtypeStruct((B, 1, N), jnp.int32),
        jax.ShapeDtypeStruct((B, 1, N), jnp.float32),
        jax.ShapeDtypeStruct((B, 1, N), jnp.int32),
    )
    return pl.pallas_call(
        _iou_argmax_kernel,
        grid=(B,),
        in_specs=[roi_spec, roi_spec, gt_spec, gt_spec],
        out_specs=(out_spec, out_spec, out_spec, out_spec),
        out_shape=out_shape,
        compiler_params=pltpu.CompilerParams(
            dimension_semantics=("parallel",),
            vmem_limit_bytes=_VMEM_LIMIT_BYTES),
    )(jnp.asarray(rois_l_t), jnp.asarray(rois_r_t),
      jnp.asarray(gt_l4), jnp.asarray(gt_r4))


# ---------------------------------------------------------------------------
# Kernel 2: bbox/dim/kpts targets + label-conditioned expansion
#           single packed input slab (28, R) -> single packed output slab (27, R)
# ---------------------------------------------------------------------------
def _targets_kernel(x_ref, y_ref):
    lab = x_ref[_ROW_LABEL:_ROW_LABEL + 1, :]        # (1, R)
    fg = lab > 0.0
    is_one = lab == 1.0
    fg_f = fg.astype(jnp.float32)

    def bbox_rows(base_ex, base_gt):
        ex_x1 = x_ref[base_ex + 0:base_ex + 1, :]
        ex_y1 = x_ref[base_ex + 1:base_ex + 2, :]
        ex_x2 = x_ref[base_ex + 2:base_ex + 3, :]
        ex_y2 = x_ref[base_ex + 3:base_ex + 4, :]
        gt_x1 = x_ref[base_gt + 0:base_gt + 1, :]
        gt_y1 = x_ref[base_gt + 1:base_gt + 2, :]
        gt_x2 = x_ref[base_gt + 2:base_gt + 3, :]
        gt_y2 = x_ref[base_gt + 3:base_gt + 4, :]

        ex_w = ex_x2 - ex_x1 + 1.0
        ex_h = ex_y2 - ex_y1 + 1.0
        inv_w = pl.reciprocal(ex_w)                  # reused for dx, dw, kpts
        inv_h = pl.reciprocal(ex_h)
        ex_cx = ex_x1 + 0.5 * ex_w
        ex_cy = ex_y1 + 0.5 * ex_h
        gt_w = gt_x2 - gt_x1 + 1.0
        gt_h = gt_y2 - gt_y1 + 1.0
        gt_cx = gt_x1 + 0.5 * gt_w
        gt_cy = gt_y1 + 0.5 * gt_h

        dx = (gt_cx - ex_cx) * inv_w
        dy = (gt_cy - ex_cy) * inv_h
        dw = jnp.log(gt_w * inv_w)
        dh = jnp.log(gt_h * inv_h)
        rows = [jnp.where(fg, (d - _BM[c]) * _BS_INV[c], 0.0)
                for c, d in enumerate((dx, dy, dw, dh))]
        return jnp.concatenate(rows, axis=0), ex_x1, inv_w   # (4, R)

    bt_l, ex_x1_l, inv_w_l = bbox_rows(_ROW_ROIS_L, _ROW_GT_L)
    bt_r, _, _ = bbox_rows(_ROW_ROIS_R, _ROW_GT_R)

    # bbox inside / outside weights (label-conditioned; constants baked in)
    biw = jnp.concatenate([fg_f * _BIW[c] for c in range(4)], axis=0)
    bow = jnp.concatenate(
        [fg_f * (1.0 if _BIW[c] > 0.0 else 0.0) for c in range(4)], axis=0)

    # dim / orientation targets
    dim_rows = []
    for c in range(5):
        d = x_ref[_ROW_DIM + c:_ROW_DIM + c + 1, :]
        dim_rows.append(jnp.where(fg, (d - _DM[c]) * _DS_INV[c], 0.0))
    dim_t = jnp.concatenate(dim_rows, axis=0)        # (5, R)

    # keypoint targets (left rois drive start / width; inv_w reused)
    grid_size = float(CFG["KPTS_GRID"])
    kp = x_ref[_ROW_KPTS:_ROW_KPTS + 6, :]           # (6, R)
    scale = grid_size * inv_w_l                      # (1, R)
    t = jnp.round((kp - ex_x1_l) * scale)
    t = jnp.where(jnp.logical_or(t < 0.0, t > grid_size - 1.0), -225.0, t)
    t4 = t[0:4, :]
    pos = jnp.max(t4, axis=0, keepdims=True)         # (1, R)
    iota = lax.broadcasted_iota(jnp.float32, t4.shape, 0)
    typ = jnp.min(jnp.where(t4 == pos, iota, 4.0), axis=0, keepdims=True)
    col0 = typ * grid_size + pos
    tgt = jnp.concatenate([col0, t[4:6, :]], axis=0)  # (3, R)
    w = jnp.where(tgt < 0.0, 0.0, 1.0)
    tgt = jnp.where(tgt < 0.0, 0.0, tgt)
    kt = jnp.where(is_one, tgt, 0.0)
    kw = jnp.where(is_one, w, 0.0)

    y_ref[0:4, :] = bt_l
    y_ref[4:8, :] = bt_r
    y_ref[8:12, :] = biw
    y_ref[12:16, :] = bow
    y_ref[16:21, :] = dim_t
    y_ref[21:24, :] = kt
    y_ref[24:27, :] = kw


def compute_targets_packed(x_slab):
    """x_slab: (B, 28, R) f32  ->  (B, 27, R) f32 output slab."""
    B, F, R = x_slab.shape
    assert F == _F_IN
    return pl.pallas_call(
        _targets_kernel,
        grid=(B,),
        in_specs=[pl.BlockSpec((None, _F_IN, R), lambda b: (b, 0, 0))],
        out_specs=pl.BlockSpec((None, _F_OUT, R), lambda b: (b, 0, 0)),
        out_shape=jax.ShapeDtypeStruct((B, _F_OUT, R), jnp.float32),
        compiler_params=pltpu.CompilerParams(
            dimension_semantics=("parallel",),
            vmem_limit_bytes=_VMEM_LIMIT_BYTES),
    )(jnp.asarray(x_slab))


# ---------------------------------------------------------------------------
# The layer
# ---------------------------------------------------------------------------
class ProposalTargetLayerPallas:
    def __init__(self, nclasses, seed=0):
        self._num_classes = nclasses
        # Persistent RNG: fresh randomness every forward call (not re-seeded
        # per call), matching the reference layer's use of np.random.
        self._rng = np.random.RandomState(seed)

    def __call__(self, *args, **kwargs):
        return self.forward(*args, **kwargs)

    def forward(self, all_rois_left, all_rois_right, gt_boxes_left,
                gt_boxes_right, gt_dim_orien, gt_kpts, num_boxes):
        # TODO(synk): num_boxes is accepted but unused, exactly as in the
        # reference _sample_rois_pytorch (zero-padded gt rows are masked by the
        # all-zero-box heuristic inside bbox_overlaps_batch).
        del num_boxes

        # Single D2H pull of every input; host copies are reused for the whole
        # sampling stage (no re-download of data we already have).
        (rois_l_np, rois_r_np, gt_l_np, gt_r_np, dim_np, kpts_np) = [
            np.asarray(a, dtype=np.float32) for a in jax.device_get(
                (all_rois_left, all_rois_right, gt_boxes_left, gt_boxes_right,
                 gt_dim_orien, gt_kpts))]

        B, K, _ = gt_l_np.shape

        # append gt boxes to the proposal list (host-side; col 0 = 0)
        gt_append_l = np.zeros((B, K, 5), np.float32)
        gt_append_l[:, :, 1:5] = gt_l_np[:, :, :4]
        gt_append_r = np.zeros((B, K, 5), np.float32)
        gt_append_r[:, :, 1:5] = gt_r_np[:, :, :4]
        rois_ext_l = np.concatenate([rois_l_np, gt_append_l], axis=1)  # (B,N,5)
        rois_ext_r = np.concatenate([rois_r_np, gt_append_r], axis=1)

        rois_per_image = int(CFG["BATCH_SIZE"] / 1)
        fg_rois_per_image = int(np.round(CFG["FG_FRACTION"] * rois_per_image))
        R = rois_per_image

        # ---- Pallas kernel 1: pairwise IoU + max/argmax (N on lanes) -----
        rois_l_t = np.ascontiguousarray(
            np.transpose(rois_ext_l[:, :, 1:5], (0, 2, 1)))   # (B, 4, N)
        rois_r_t = np.ascontiguousarray(
            np.transpose(rois_ext_r[:, :, 1:5], (0, 2, 1)))
        gt_l4 = np.ascontiguousarray(gt_l_np[:, :, :4])
        gt_r4 = np.ascontiguousarray(gt_r_np[:, :, :4])

        max_l_d, arg_l_d, max_r_d, arg_r_d = iou_max_argmax(
            rois_l_t, rois_r_t, gt_l4, gt_r4)
        # only these four tiny (B, N) arrays cross the device->host boundary
        max_l, arg_l, max_r, arg_r = jax.device_get(
            (max_l_d, arg_l_d, max_r_d, arg_r_d))
        max_l = max_l[:, 0, :]
        max_r = max_r[:, 0, :]
        arg_l = arg_l[:, 0, :].astype(np.int64)
        arg_r = arg_r[:, 0, :].astype(np.int64)

        # labels[b, n] = gt_boxes_left[b, gt_assignment_left[b, n], 4]
        labels_np = np.take_along_axis(gt_l_np[:, :, 4], arg_l, axis=1)

        # ---- host-side fg/bg sampling (data-dependent; not Pallas) -------
        # TODO(synk): nonzero/union1d/random permutation with dynamic sizes has
        # no clean Pallas equivalent; kept on host with a persistent RNG.
        rng = self._rng
        labels_batch = np.zeros((B, R), np.float32)
        rois_batch_l = np.zeros((B, R, 5), np.float32)
        rois_batch_r = np.zeros((B, R, 5), np.float32)
        x_slab = np.zeros((B, _F_IN, R), np.float32)

        for i in range(B):
            fg_inds = np.nonzero((max_l[i] >= CFG["FG_THRESH"])
                                 & (max_r[i] >= CFG["FG_THRESH"])
                                 & (arg_l[i] == arg_r[i]))[0]
            bg_l = np.nonzero((max_l[i] < CFG["BG_THRESH_HI"])
                              & (max_l[i] >= CFG["BG_THRESH_LO"]))[0]
            bg_r = np.nonzero((max_r[i] < CFG["BG_THRESH_HI"])
                              & (max_r[i] >= CFG["BG_THRESH_LO"]))[0]
            bg_inds = np.union1d(bg_l, bg_r)
            fg_num, bg_num = fg_inds.size, bg_inds.size

            if fg_num > 0 and bg_num > 0:
                fg_this = min(fg_rois_per_image, fg_num)
                perm = rng.permutation(fg_num)
                fg_inds = fg_inds[perm[:fg_this]]
                bg_this = R - fg_this
                rand = np.floor(rng.rand(bg_this) * bg_num).astype(np.int64)
                bg_inds = bg_inds[rand]
            elif fg_num > 0 and bg_num == 0:
                rand = np.floor(rng.rand(R) * fg_num).astype(np.int64)
                fg_inds = fg_inds[rand]
                fg_this = R
            elif bg_num > 0 and fg_num == 0:
                rand = np.floor(rng.rand(R) * bg_num).astype(np.int64)
                bg_inds = bg_inds[rand]
                fg_this = 0
            else:
                raise ValueError("bg_num_rois = 0 and fg_num_rois = 0, "
                                 "this should not happen!")

            keep = np.concatenate([fg_inds, bg_inds]).astype(np.int64)[:R]
            labels_batch[i] = labels_np[i][keep]
            labels_batch[i, fg_this:] = 0
            rois_batch_l[i] = rois_ext_l[i][keep]
            rois_batch_l[i, :, 0] = i
            rois_batch_r[i] = rois_ext_r[i][keep]
            rois_batch_r[i, :, 0] = i

            a_l = arg_l[i][keep]
            a_r = arg_r[i][keep]
            # fill the packed (feature-major, R-on-lanes) kernel-2 input slab
            x_slab[i, _ROW_ROIS_L:_ROW_ROIS_L + 4] = rois_batch_l[i, :, 1:5].T
            x_slab[i, _ROW_GT_L:_ROW_GT_L + 4] = gt_l_np[i][a_l][:, :4].T
            x_slab[i, _ROW_ROIS_R:_ROW_ROIS_R + 4] = rois_batch_r[i, :, 1:5].T
            x_slab[i, _ROW_GT_R:_ROW_GT_R + 4] = gt_r_np[i][a_r][:, :4].T
            x_slab[i, _ROW_DIM:_ROW_DIM + 5] = dim_np[i][a_l].T
            x_slab[i, _ROW_KPTS:_ROW_KPTS + 6] = kpts_np[i][a_l].T
            x_slab[i, _ROW_LABEL] = labels_batch[i]

        # ---- Pallas kernel 2: targets (single packed in/out slab) --------
        y = compute_targets_packed(x_slab)               # (B, 27, R)
        yt = jnp.transpose(y, (0, 2, 1))                 # (B, R, 27)
        bbox_targets_left = yt[:, :, 0:4]
        bbox_targets_right = yt[:, :, 4:8]
        bbox_inside_weights = yt[:, :, 8:12]
        bbox_outside_weights = yt[:, :, 12:16]
        dim_orien_targets = yt[:, :, 16:21]
        kpts_targets = yt[:, :, 21:24].astype(jnp.int32)
        kpts_weight = yt[:, :, 24:27]

        rois_left = jnp.asarray(rois_batch_l)
        rois_right = jnp.asarray(rois_batch_r)
        labels = jnp.asarray(labels_batch)

        return (rois_left, rois_right, labels, bbox_targets_left,
                bbox_targets_right, dim_orien_targets, kpts_targets,
                kpts_weight, bbox_inside_weights, bbox_outside_weights)


# ---------------------------------------------------------------------------
# Example run
# ---------------------------------------------------------------------------
if __name__ == "__main__":
    key = jax.random.PRNGKey(0)
    B, P, K, nclasses = 2, 20, 3, 2   # batch, proposals, gt boxes, classes

    ks = jax.random.split(key, 10)
    x1 = jax.random.uniform(ks[0], (B, K, 1), minval=0.0, maxval=200.0)
    y1 = jax.random.uniform(ks[1], (B, K, 1), minval=0.0, maxval=200.0)
    w = jax.random.uniform(ks[2], (B, K, 1), minval=40.0, maxval=120.0)
    h = jax.random.uniform(ks[3], (B, K, 1), minval=40.0, maxval=120.0)
    cls = jnp.ones((B, K, 1), jnp.float32)
    gt_boxes_left = jnp.concatenate([x1, y1, x1 + w, y1 + h, cls], -1)
    disp = jax.random.uniform(ks[4], (B, K, 1), minval=5.0, maxval=20.0)
    gt_boxes_right = jnp.concatenate(
        [x1 - disp, y1, x1 + w - disp, y1 + h, cls], -1)

    gt_dim_orien = jax.random.uniform(ks[5], (B, K, 5),
                                      minval=-1.0, maxval=4.0)
    frac = jax.random.uniform(ks[6], (B, K, 6), minval=0.0, maxval=1.0)
    gt_kpts = x1 + frac * w   # keypoint x-coords inside each gt box

    # proposals: col 0 = batch index (0), cols 1:5 = box
    px1 = jax.random.uniform(ks[7], (B, P, 1), minval=0.0, maxval=300.0)
    py1 = jax.random.uniform(ks[8], (B, P, 1), minval=0.0, maxval=300.0)
    pw = jax.random.uniform(ks[9], (B, P, 2), minval=20.0, maxval=100.0)
    zeros = jnp.zeros((B, P, 1), jnp.float32)
    all_rois_left = jnp.concatenate(
        [zeros, px1, py1, px1 + pw[..., :1], py1 + pw[..., 1:]], -1)
    all_rois_right = jnp.concatenate(
        [zeros, px1 - 8.0, py1, px1 + pw[..., :1] - 8.0, py1 + pw[..., 1:]], -1)

    num_boxes = jnp.full((B,), K, jnp.int32)

    layer = ProposalTargetLayerPallas(nclasses)
    outs = layer(all_rois_left, all_rois_right, gt_boxes_left,
                 gt_boxes_right, gt_dim_orien, gt_kpts, num_boxes)
    for o in outs:
        jax.block_until_ready(o)
    print("KERNEL_OK")
</pallas_src>

<mosaic_0001>
module attributes {stable_mosaic.version = 11 : i64} {
  func.func @_iou_argmax_kernel(%arg0: i32, %arg1: memref<1x4x23xf32, #tpu.memory_space<vmem>>, %arg2: memref<1x4x23xf32, #tpu.memory_space<vmem>>, %arg3: memref<1x3x4xf32, #tpu.memory_space<vmem>>, %arg4: memref<1x3x4xf32, #tpu.memory_space<vmem>>, %arg5: memref<1x1x23xf32, #tpu.memory_space<vmem>>, %arg6: memref<1x1x23xi32, #tpu.memory_space<vmem>>, %arg7: memref<1x1x23xf32, #tpu.memory_space<vmem>>, %arg8: memref<1x1x23xi32, #tpu.memory_space<vmem>>) attributes {dimension_semantics = [#tpu.dimension_semantics<parallel>], iteration_bounds = array<i64: 2>, scalar_prefetch = 0 : i64, scratch_operands = 0 : i64, tpu.core_type = #tpu.core_type<tc>, window_params = [{transform_indices = @transform_0, window_bounds = array<i64: 1, 4, 23>}, {transform_indices = @transform_1, window_bounds = array<i64: 1, 4, 23>}, {transform_indices = @transform_2, window_bounds = array<i64: 1, 3, 4>}, {transform_indices = @transform_3, window_bounds = array<i64: 1, 3, 4>}, {transform_indices = @transform_4, window_bounds = array<i64: 1, 1, 23>}, {transform_indices = @transform_5, window_bounds = array<i64: 1, 1, 23>}, {transform_indices = @transform_6, window_bounds = array<i64: 1, 1, 23>}, {transform_indices = @transform_7, window_bounds = array<i64: 1, 1, 23>}]} {
    %c0 = arith.constant 0 : index
    %c0_0 = arith.constant 0 : index
    %c0_1 = arith.constant 0 : index
    %0 = vector.load %arg1[%c0, %c0_0, %c0_1] : memref<1x4x23xf32, #tpu.memory_space<vmem>>, vector<1x1x23xf32>
    %1 = vector.shape_cast %0 : vector<1x1x23xf32> to vector<1x23xf32>
    %c0_2 = arith.constant 0 : index
    %c1 = arith.constant 1 : index
    %c0_3 = arith.constant 0 : index
    %2 = vector.load %arg1[%c0_2, %c1, %c0_3] : memref<1x4x23xf32, #tpu.memory_space<vmem>>, vector<1x1x23xf32>
    %3 = vector.shape_cast %2 : vector<1x1x23xf32> to vector<1x23xf32>
    %c0_4 = arith.constant 0 : index
    %c2 = arith.constant 2 : index
    %c0_5 = arith.constant 0 : index
    %4 = vector.load %arg1[%c0_4, %c2, %c0_5] : memref<1x4x23xf32, #tpu.memory_space<vmem>>, vector<1x1x23xf32>
    %5 = vector.shape_cast %4 : vector<1x1x23xf32> to vector<1x23xf32>
    %c0_6 = arith.constant 0 : index
    %c3 = arith.constant 3 : index
    %c0_7 = arith.constant 0 : index
    %6 = vector.load %arg1[%c0_6, %c3, %c0_7] : memref<1x4x23xf32, #tpu.memory_space<vmem>>, vector<1x1x23xf32>
    %7 = vector.shape_cast %6 : vector<1x1x23xf32> to vector<1x23xf32>
    %8 = arith.subf %5, %1 : vector<1x23xf32>
    %cst = arith.constant 1.000000e+00 : f32
    %9 = vector.broadcast %cst : f32 to vector<1x23xf32>
    %10 = arith.addf %8, %9 : vector<1x23xf32>
    %11 = arith.subf %7, %3 : vector<1x23xf32>
    %cst_8 = arith.constant 1.000000e+00 : f32
    %12 = vector.broadcast %cst_8 : f32 to vector<1x23xf32>
    %13 = arith.addf %11, %12 : vector<1x23xf32>
    %14 = arith.mulf %10, %13 : vector<1x23xf32>
    %cst_9 = arith.constant 1.000000e+00 : f32
    %15 = vector.broadcast %cst_9 : f32 to vector<1x23xf32>
    %16 = arith.cmpf oeq, %10, %15 : vector<1x23xf32>
    %cst_10 = arith.constant 1.000000e+00 : f32
    %17 = vector.broadcast %cst_10 : f32 to vector<1x23xf32>
    %18 = arith.cmpf oeq, %13, %17 : vector<1x23xf32>
    %19 = arith.andi %16, %18 : vector<1x23xi1>
    %c0_11 = arith.constant 0 : index
    %c0_12 = arith.constant 0 : index
    %c0_13 = arith.constant 0 : index
    %20 = vector.load %arg3[%c0_11, %c0_12, %c0_13] : memref<1x3x4xf32, #tpu.memory_space<vmem>>, vector<1x3x4xf32>
    %21 = vector.shape_cast %20 : vector<1x3x4xf32> to vector<3x4xf32>
    %22 = vector.extract_strided_slice %21 {offsets = [0, 0], sizes = [3, 1], strides = [1, 1]} : vector<3x4xf32> to vector<3x1xf32>
    %23 = vector.extract_strided_slice %21 {offsets = [0, 1], sizes = [3, 1], strides = [1, 1]} : vector<3x4xf32> to vector<3x1xf32>
    %24 = vector.extract_strided_slice %21 {offsets = [0, 2], sizes = [3, 1], strides = [1, 1]} : vector<3x4xf32> to vector<3x1xf32>
    %25 = vector.extract_strided_slice %21 {offsets = [0, 3], sizes = [3, 1], strides = [1, 1]} : vector<3x4xf32> to vector<3x1xf32>
    %26 = arith.subf %24, %22 : vector<3x1xf32>
    %cst_14 = arith.constant 1.000000e+00 : f32
    %27 = vector.broadcast %cst_14 : f32 to vector<3x1xf32>
    %28 = arith.addf %26, %27 : vector<3x1xf32>
    %29 = arith.subf %25, %23 : vector<3x1xf32>
    %cst_15 = arith.constant 1.000000e+00 : f32
    %30 = vector.broadcast %cst_15 : f32 to vector<3x1xf32>
    %31 = arith.addf %29, %30 : vector<3x1xf32>
    %32 = arith.mulf %28, %31 : vector<3x1xf32>
    %cst_16 = arith.constant 1.000000e+00 : f32
    %33 = vector.broadcast %cst_16 : f32 to vector<3x1xf32>
    %34 = arith.cmpf oeq, %28, %33 : vector<3x1xf32>
    %cst_17 = arith.constant 1.000000e+00 : f32
    %35 = vector.broadcast %cst_17 : f32 to vector<3x1xf32>
    %36 = arith.cmpf oeq, %31, %35 : vector<3x1xf32>
    %37 = arith.andi %34, %36 : vector<3x1xi1>
    %38 = vector.broadcast %5 : vector<1x23xf32> to vector<3x23xf32>
    %39 = vector.broadcast %24 : vector<3x1xf32> to vector<3x23xf32>
    %40 = arith.minimumf %38, %39 : vector<3x23xf32>
    %41 = vector.broadcast %1 : vector<1x23xf32> to vector<3x23xf32>
    %42 = vector.broadcast %22 : vector<3x1xf32> to vector<3x23xf32>
    %43 = arith.maximumf %41, %42 : vector<3x23xf32>
    %44 = arith.subf %40, %43 : vector<3x23xf32>
    %cst_18 = arith.constant 1.000000e+00 : f32
    %45 = vector.broadcast %cst_18 : f32 to vector<3x23xf32>
    %46 = arith.addf %44, %45 : vector<3x23xf32>
    %cst_19 = arith.constant 0.000000e+00 : f32
    %47 = vector.broadcast %cst_19 : f32 to vector<3x23xf32>
    %48 = arith.maximumf %46, %47 : vector<3x23xf32>
    %49 = vector.broadcast %7 : vector<1x23xf32> to vector<3x23xf32>
    %50 = vector.broadcast %25 : vector<3x1xf32> to vector<3x23xf32>
    %51 = arith.minimumf %49, %50 : vector<3x23xf32>
    %52 = vector.broadcast %3 : vector<1x23xf32> to vector<3x23xf32>
    %53 = vector.broadcast %23 : vector<3x1xf32> to vector<3x23xf32>
    %54 = arith.maximumf %52, %53 : vector<3x23xf32>
    %55 = arith.subf %51, %54 : vector<3x23xf32>
    %cst_20 = arith.constant 1.000000e+00 : f32
    %56 = vector.broadcast %cst_20 : f32 to vector<3x23xf32>
    %57 = arith.addf %55, %56 : vector<3x23xf32>
    %cst_21 = arith.constant 0.000000e+00 : f32
    %58 = vector.broadcast %cst_21 : f32 to vector<3x23xf32>
    %59 = arith.maximumf %57, %58 : vector<3x23xf32>
    %60 = arith.mulf %48, %59 : vector<3x23xf32>
    %61 = vector.broadcast %14 : vector<1x23xf32> to vector<3x23xf32>
    %62 = vector.broadcast %32 : vector<3x1xf32> to vector<3x23xf32>
    %63 = arith.addf %61, %62 : vector<3x23xf32>
    %64 = arith.subf %63, %60 : vector<3x23xf32>
    %65 = arith.divf %60, %64 : vector<3x23xf32>
    %cst_22 = arith.constant 0.000000e+00 : f32
    %66 = vector.shape_cast %37 : vector<3x1xi1> to vector<3x1xi1>
    %67 = vector.broadcast %66 : vector<3x1xi1> to vector<3x23xi1>
    %68 = vector.broadcast %cst_22 : f32 to vector<3x23xf32>
    %69 = arith.select %67, %68, %65 : vector<3x23xi1>, vector<3x23xf32>
    %cst_23 = arith.constant -1.000000e+00 : f32
    %70 = vector.shape_cast %19 : vector<1x23xi1> to vector<1x23xi1>
    %71 = vector.broadcast %70 : vector<1x23xi1> to vector<3x23xi1>
    %72 = vector.broadcast %cst_23 : f32 to vector<3x23xf32>
    %73 = arith.select %71, %72, %69 : vector<3x23xi1>, vector<3x23xf32>
    %cst_24 = arith.constant dense<0xFF800000> : vector<23xf32>
    %74 = vector.multi_reduction <maximumf>, %73, %cst_24 [0] : vector<3x23xf32> to vector<23xf32>
    %75 = vector.shape_cast %74 : vector<23xf32> to vector<1x23xf32>
    %76 = tpu.iota {dimensions = array<i32: 0>} : vector<3x23xi32>
    %77 = vector.broadcast %75 : vector<1x23xf32> to vector<3x23xf32>
    %78 = arith.cmpf oeq, %73, %77 : vector<3x23xf32>
    %c3_i32 = arith.constant 3 : i32
    %79 = vector.broadcast %c3_i32 : i32 to vector<3x23xi32>
    %80 = arith.select %78, %76, %79 : vector<3x23xi1>, vector<3x23xi32>
    %cst_25 = arith.constant dense<2147483647> : vector<23xi32>
    %81 = vector.multi_reduction <minsi>, %80, %cst_25 [0] : vector<3x23xi32> to vector<23xi32>
    %82 = vector.shape_cast %81 : vector<23xi32> to vector<1x23xi32>
    %c0_26 = arith.constant 0 : index
    %c0_27 = arith.constant 0 : index
    %c0_28 = arith.constant 0 : index
    %83 = vector.load %arg5[%c0_26, %c0_27, %c0_28] : memref<1x1x23xf32, #tpu.memory_space<vmem>>, vector<1x1x23xf32>
    %84 = vector.shape_cast %83 : vector<1x1x23xf32> to vector<1x23xf32>
    %85 = vector.shape_cast %75 : vector<1x23xf32> to vector<1x1x23xf32>
    tpu.vector_store %arg5[%c0_26, %c0_27, %c0_28], %85 {strides = array<i32>} : memref<1x1x23xf32, #tpu.memory_space<vmem>>, vector<1x1x23xf32>,
    %c0_29 = arith.constant 0 : index
    %c0_30 = arith.constant 0 : index
    %c0_31 = arith.constant 0 : index
    %86 = vector.load %arg6[%c0_29, %c0_30, %c0_31] : memref<1x1x23xi32, #tpu.memory_space<vmem>>, vector<1x1x23xi32>
    %87 = vector.shape_cast %86 : vector<1x1x23xi32> to vector<1x23xi32>
    %88 = vector.shape_cast %82 : vector<1x23xi32> to vector<1x1x23xi32>
    tpu.vector_store %arg6[%c0_29, %c0_30, %c0_31], %88 {strides = array<i32>} : memref<1x1x23xi32, #tpu.memory_space<vmem>>, vector<1x1x23xi32>,
    %c0_32 = arith.constant 0 : index
    %c0_33 = arith.constant 0 : index
    %c0_34 = arith.constant 0 : index
    %89 = vector.load %arg2[%c0_32, %c0_33, %c0_34] : memref<1x4x23xf32, #tpu.memory_space<vmem>>, vector<1x1x23xf32>
    %90 = vector.shape_cast %89 : vector<1x1x23xf32> to vector<1x23xf32>
    %c0_35 = arith.constant 0 : index
    %c1_36 = arith.constant 1 : index
    %c0_37 = arith.constant 0 : index
    %91 = vector.load %arg2[%c0_35, %c1_36, %c0_37] : memref<1x4x23xf32, #tpu.memory_space<vmem>>, vector<1x1x23xf32>
    %92 = vector.shape_cast %91 : vector<1x1x23xf32> to vector<1x23xf32>
    %c0_38 = arith.constant 0 : index
    %c2_39 = arith.constant 2 : index
    %c0_40 = arith.constant 0 : index
    %93 = vector.load %arg2[%c0_38, %c2_39, %c0_40] : memref<1x4x23xf32, #tpu.memory_space<vmem>>, vector<1x1x23xf32>
    %94 = vector.shape_cast %93 : vector<1x1x23xf32> to vector<1x23xf32>
    %c0_41 = arith.constant 0 : index
    %c3_42 = arith.constant 3 : index
    %c0_43 = arith.constant 0 : index
    %95 = vector.load %arg2[%c0_41, %c3_42, %c0_43] : memref<1x4x23xf32, #tpu.memory_space<vmem>>, vector<1x1x23xf32>
    %96 = vector.shape_cast %95 : vector<1x1x23xf32> to vector<1x23xf32>
    %97 = arith.subf %94, %90 : vector<1x23xf32>
    %cst_44 = arith.constant 1.000000e+00 : f32
    %98 = vector.broadcast %cst_44 : f32 to vector<1x23xf32>
    %99 = arith.addf %97, %98 : vector<1x23xf32>
    %100 = arith.subf %96, %92 : vector<1x23xf32>
    %cst_45 = arith.constant 1.000000e+00 : f32
    %101 = vector.broadcast %cst_45 : f32 to vector<1x23xf32>
    %102 = arith.addf %100, %101 : vector<1x23xf32>
    %103 = arith.mulf %99, %102 : vector<1x23xf32>
    %cst_46 = arith.constant 1.000000e+00 : f32
    %104 = vector.broadcast %cst_46 : f32 to vector<1x23xf32>
    %105 = arith.cmpf oeq, %99, %104 : vector<1x23xf32>
    %cst_47 = arith.constant 1.000000e+00 : f32
    %106 = vector.broadcast %cst_47 : f32 to vector<1x23xf32>
    %107 = arith.cmpf oeq, %102, %106 : vector<1x23xf32>
    %108 = arith.andi %105, %107 : vector<1x23xi1>
    %c0_48 = arith.constant 0 : index
    %c0_49 = arith.constant 0 : index
    %c0_50 = arith.constant 0 : index
    %109 = vector.load %arg4[%c0_48, %c0_49, %c0_50] : memref<1x3x4xf32, #tpu.memory_space<vmem>>, vector<1x3x4xf32>
    %110 = vector.shape_cast %109 : vector<1x3x4xf32> to vector<3x4xf32>
    %111 = vector.extract_strided_slice %110 {offsets = [0, 0], sizes = [3, 1], strides = [1, 1]} : vector<3x4xf32> to vector<3x1xf32>
    %112 = vector.extract_strided_slice %110 {offsets = [0, 1], sizes = [3, 1], strides = [1, 1]} : vector<3x4xf32> to vector<3x1xf32>
    %113 = vector.extract_strided_slice %110 {offsets = [0, 2], sizes = [3, 1], strides = [1, 1]} : vector<3x4xf32> to vector<3x1xf32>
    %114 = vector.extract_strided_slice %110 {offsets = [0, 3], sizes = [3, 1], strides = [1, 1]} : vector<3x4xf32> to vector<3x1xf32>
    %115 = arith.subf %113, %111 : vector<3x1xf32>
    %cst_51 = arith.constant 1.000000e+00 : f32
    %116 = vector.broadcast %cst_51 : f32 to vector<3x1xf32>
    %117 = arith.addf %115, %116 : vector<3x1xf32>
    %118 = arith.subf %114, %112 : vector<3x1xf32>
    %cst_52 = arith.constant 1.000000e+00 : f32
    %119 = vector.broadcast %cst_52 : f32 to vector<3x1xf32>
    %120 = arith.addf %118, %119 : vector<3x1xf32>
    %121 = arith.mulf %117, %120 : vector<3x1xf32>
    %cst_53 = arith.constant 1.000000e+00 : f32
    %122 = vector.broadcast %cst_53 : f32 to vector<3x1xf32>
    %123 = arith.cmpf oeq, %117, %122 : vector<3x1xf32>
    %cst_54 = arith.constant 1.000000e+00 : f32
    %124 = vector.broadcast %cst_54 : f32 to vector<3x1xf32>
    %125 = arith.cmpf oeq, %120, %124 : vector<3x1xf32>
    %126 = arith.andi %123, %125 : vector<3x1xi1>
    %127 = vector.broadcast %94 : vector<1x23xf32> to vector<3x23xf32>
    %128 = vector.broadcast %113 : vector<3x1xf32> to vector<3x23xf32>
    %129 = arith.minimumf %127, %128 : vector<3x23xf32>
    %130 = vector.broadcast %90 : vector<1x23xf32> to vector<3x23xf32>
    %131 = vector.broadcast %111 : vector<3x1xf32> to vector<3x23xf32>
    %132 = arith.maximumf %130, %131 : vector<3x23xf32>
    %133 = arith.subf %129, %132 : vector<3x23xf32>
    %cst_55 = arith.constant 1.000000e+00 : f32
    %134 = vector.broadcast %cst_55 : f32 to vector<3x23xf32>
    %135 = arith.addf %133, %134 : vector<3x23xf32>
    %cst_56 = arith.constant 0.000000e+00 : f32
    %136 = vector.broadcast %cst_56 : f32 to vector<3x23xf32>
    %137 = arith.maximumf %135, %136 : vector<3x23xf32>
    %138 = vector.broadcast %96 : vector<1x23xf32> to vector<3x23xf32>
    %139 = vector.broadcast %114 : vector<3x1xf32> to vector<3x23xf32>
    %140 = arith.minimumf %138, %139 : vector<3x23xf32>
    %141 = vector.broadcast %92 : vector<1x23xf32> to vector<3x23xf32>
    %142 = vector.broadcast %112 : vector<3x1xf32> to vector<3x23xf32>
    %143 = arith.maximumf %141, %142 : vector<3x23xf32>
    %144 = arith.subf %140, %143 : vector<3x23xf32>
    %cst_57 = arith.constant 1.000000e+00 : f32
    %145 = vector.broadcast %cst_57 : f32 to vector<3x23xf32>
    %146 = arith.addf %144, %145 : vector<3x23xf32>
    %cst_58 = arith.constant 0.000000e+00 : f32
    %147 = vector.broadcast %cst_58 : f32 to vector<3x23xf32>
    %148 = arith.maximumf %146, %147 : vector<3x23xf32>
    %149 = arith.mulf %137, %148 : vector<3x23xf32>
    %150 = vector.broadcast %103 : vector<1x23xf32> to vector<3x23xf32>
    %151 = vector.broadcast %121 : vector<3x1xf32> to vector<3x23xf32>
    %152 = arith.addf %150, %151 : vector<3x23xf32>
    %153 = arith.subf %152, %149 : vector<3x23xf32>
    %154 = arith.divf %149, %153 : vector<3x23xf32>
    %cst_59 = arith.constant 0.000000e+00 : f32
    %155 = vector.shape_cast %126 : vector<3x1xi1> to vector<3x1xi1>
    %156 = vector.broadcast %155 : vector<3x1xi1> to vector<3x23xi1>
    %157 = vector.broadcast %cst_59 : f32 to vector<3x23xf32>
    %158 = arith.select %156, %157, %154 : vector<3x23xi1>, vector<3x23xf32>
    %cst_60 = arith.constant -1.000000e+00 : f32
    %159 = vector.shape_cast %108 : vector<1x23xi1> to vector<1x23xi1>
    %160 = vector.broadcast %159 : vector<1x23xi1> to vector<3x23xi1>
    %161 = vector.broadcast %cst_60 : f32 to vector<3x23xf32>
    %162 = arith.select %160, %161, %158 : vector<3x23xi1>, vector<3x23xf32>
    %cst_61 = arith.constant dense<0xFF800000> : vector<23xf32>
    %163 = vector.multi_reduction <maximumf>, %162, %cst_61 [0] : vector<3x23xf32> to vector<23xf32>
    %164 = vector.shape_cast %163 : vector<23xf32> to vector<1x23xf32>
    %165 = tpu.iota {dimensions = array<i32: 0>} : vector<3x23xi32>
    %166 = vector.broadcast %164 : vector<1x23xf32> to vector<3x23xf32>
    %167 = arith.cmpf oeq, %162, %166 : vector<3x23xf32>
    %c3_i32_62 = arith.constant 3 : i32
    %168 = vector.broadcast %c3_i32_62 : i32 to vector<3x23xi32>
    %169 = arith.select %167, %165, %168 : vector<3x23xi1>, vector<3x23xi32>
    %cst_63 = arith.constant dense<2147483647> : vector<23xi32>
    %170 = vector.multi_reduction <minsi>, %169, %cst_63 [0] : vector<3x23xi32> to vector<23xi32>
    %171 = vector.shape_cast %170 : vector<23xi32> to vector<1x23xi32>
    %c0_64 = arith.constant 0 : index
    %c0_65 = arith.constant 0 : index
    %c0_66 = arith.constant 0 : index
    %172 = vector.load %arg7[%c0_64, %c0_65, %c0_66] : memref<1x1x23xf32, #tpu.memory_space<vmem>>, vector<1x1x23xf32>
    %173 = vector.shape_cast %172 : vector<1x1x23xf32> to vector<1x23xf32>
    %174 = vector.shape_cast %164 : vector<1x23xf32> to vector<1x1x23xf32>
    tpu.vector_store %arg7[%c0_64, %c0_65, %c0_66], %174 {strides = array<i32>} : memref<1x1x23xf32, #tpu.memory_space<vmem>>, vector<1x1x23xf32>,
    %c0_67 = arith.constant 0 : index
    %c0_68 = arith.constant 0 : index
    %c0_69 = arith.constant 0 : index
    %175 = vector.load %arg8[%c0_67, %c0_68, %c0_69] : memref<1x1x23xi32, #tpu.memory_space<vmem>>, vector<1x1x23xi32>
    %176 = vector.shape_cast %175 : vector<1x1x23xi32> to vector<1x23xi32>
    %177 = vector.shape_cast %171 : vector<1x23xi32> to vector<1x1x23xi32>
    tpu.vector_store %arg8[%c0_67, %c0_68, %c0_69], %177 {strides = array<i32>} : memref<1x1x23xi32, #tpu.memory_space<vmem>>, vector<1x1x23xi32>,
    return
  }
  func.func @transform_0(%arg0: i32) -> (i32, i32, i32) {
    %c0_i32 = arith.constant 0 : i32
    %c0_i32_0 = arith.constant 0 : i32
    %c0_i32_1 = arith.constant 0 : i32
    return %arg0, %c0_i32, %c0_i32_0 : i32, i32, i32
  }
  func.func @transform_1(%arg0: i32) -> (i32, i32, i32) {
    %c0_i32 = arith.constant 0 : i32
    %c0_i32_0 = arith.constant 0 : i32
    %c0_i32_1 = arith.constant 0 : i32
    return %arg0, %c0_i32, %c0_i32_0 : i32, i32, i32
  }
  func.func @transform_2(%arg0: i32) -> (i32, i32, i32) {
    %c0_i32 = arith.constant 0 : i32
    %c0_i32_0 = arith.constant 0 : i32
    %c0_i32_1 = arith.constant 0 : i32
    return %arg0, %c0_i32, %c0_i32_0 : i32, i32, i32
  }
  func.func @transform_3(%arg0: i32) -> (i32, i32, i32) {
    %c0_i32 = arith.constant 0 : i32
    %c0_i32_0 = arith.constant 0 : i32
    %c0_i32_1 = arith.constant 0 : i32
    return %arg0, %c0_i32, %c0_i32_0 : i32, i32, i32
  }
  func.func @transform_4(%arg0: i32) -> (i32, i32, i32) {
    %c0_i32 = arith.constant 0 : i32
    %c0_i32_0 = arith.constant 0 : i32
    %c0_i32_1 = arith.constant 0 : i32
    return %arg0, %c0_i32, %c0_i32_0 : i32, i32, i32
  }
  func.func @transform_5(%arg0: i32) -> (i32, i32, i32) {
    %c0_i32 = arith.constant 0 : i32
    %c0_i32_0 = arith.constant 0 : i32
    %c0_i32_1 = arith.constant 0 : i32
    return %arg0, %c0_i32, %c0_i32_0 : i32, i32, i32
  }
  func.func @transform_6(%arg0: i32) -> (i32, i32, i32) {
    %c0_i32 = arith.constant 0 : i32
    %c0_i32_0 = arith.constant 0 : i32
    %c0_i32_1 = arith.constant 0 : i32
    return %arg0, %c0_i32, %c0_i32_0 : i32, i32, i32
  }
  func.func @transform_7(%arg0: i32) -> (i32, i32, i32) {
    %c0_i32 = arith.constant 0 : i32
    %c0_i32_0 = arith.constant 0 : i32
    %c0_i32_1 = arith.constant 0 : i32
    return %arg0, %c0_i32, %c0_i32_0 : i32, i32, i32
  }
}

</mosaic_0001>

<llo_original>
// kernel: tpu_custom_call.1
$region0: #{tpu_custom_call.1}
  #allocation0 [shape = 'u32[]', space=smem, size = 0x4, offset = 0x4, fixed_abs, tag = 'smem constant byte address 0x4 - core index']
  #allocation1 [shape = 'u32[144,128]{1,0:T(1,128)}', space=vmem, size = 0x12000, scoped, tag = 'internal scratch']
  %s0 = inlined_call_operand.vmem [shape: f32[2,4,23], index: 0, kind: input, shape index: {}]
  %s1 = inlined_call_operand.vmem [shape: f32[2,4,23], index: 1, kind: input, shape index: {}]
  %s2 = inlined_call_operand.vmem [shape: f32[2,3,4], index: 2, kind: input, shape index: {}]
  %s3 = inlined_call_operand.vmem [shape: f32[2,3,4], index: 3, kind: input, shape index: {}]
  %s4 = inlined_call_operand.hbm [shape: f32[2,1,23], index: 4, kind: output, shape index: {0}]
  %s5 = inlined_call_operand.hbm [shape: s32[2,1,23], index: 5, kind: output, shape index: {1}]
  %s6 = inlined_call_operand.hbm [shape: f32[2,1,23], index: 6, kind: output, shape index: {2}]
  %s7 = inlined_call_operand.hbm [shape: s32[2,1,23], index: 7, kind: output, shape index: {3}]
  %8 = xla_tuple %s4, %s5, %s6, %s7
  %s9 = sld [smem:[#allocation0]]
  $region73: #{tpu_custom_call.1} parent=0
    _
  %s11 = ssub.s32 1, %s9
  %s12 = scalar_select 0, %s11, %s9
  $region1: #{tpu_custom_call.1} parent=0
    #allocation2 [shape = 'u8[1024]{0}', space=vmem, size = 0x400, scoped, tag = 'output window, operand 0']
    #allocation3 [shape = 's32[2]{0}', space=sflag, size = 0x8, scoped, tag = 'scoped memory for tpu_custom_call.1']
    #allocation4 [shape = 'u8[1024]{0}', space=vmem, size = 0x400, scoped, tag = 'output window, operand 1']
    #allocation5 [shape = 's32[2]{0}', space=sflag, size = 0x8, scoped, tag = 'scoped memory for tpu_custom_call.1']
    #allocation6 [shape = 'u8[1024]{0}', space=vmem, size = 0x400, scoped, tag = 'output window, operand 2']
    #allocation7 [shape = 'u8[1024]{0}', space=vmem, size = 0x400, scoped, tag = 'output window, operand 3']
    #allocation8 [shape = 's32[2]{0}', space=sflag, size = 0x8, scoped, tag = 'scoped memory for tpu_custom_call.1']
    %13 = vsyncpa [#allocation3], 0
    %s14 = scalar_lea.sflag [#allocation3], 1
    %15 = vsyncpa %s14, 0
    %16 = vsyncpa [#allocation5], 0
    %s17 = scalar_lea.sflag [#allocation5], 1
    %18 = vsyncpa %s17, 0
    %19 = vsyncpa [#allocation8], 0
    %s20 = scalar_lea.sflag [#allocation8], 1
    %21 = vsyncpa %s20, 0
    loop: start=0, step=1, limit=4
    $region2: #{tpu_custom_call.1} parent=1 // loop_pre_header
      _
    $region3: #{tpu_custom_call.1} parent=1 // loop_header
      %s23 = sphi 0, %s27
      %p24 = scmp.ge.s32.totalorder %s23, 4
      %s33 = sphi 0, %s35
      %s36 = sphi 0, %s33
      %s37 = sphi 0, %s36
      %s53 = sphi 0, %s37
      %s59 = sphi 0, %s61
      %s62 = sphi 0, %s59
      %s63 = sphi 0, %s62
      %s79 = sphi 0, %s63
      %s85 = sphi 0, %s87
      %s88 = sphi 0, %s85
      %s89 = sphi 0, %s88
      %s105 = sphi 0, %s89
      %s111 = sphi 0, %s113
      %s114 = sphi 0, %s111
      %s115 = sphi 0, %s114
      %s131 = sphi 0, %s115
      %s137 = sphi 0, %s139
      %s140 = sphi 0, %s137
      %s141 = sphi 0, %s140
      %s157 = sphi 0, %s141
      %s163 = sphi 0, %s165
      %s166 = sphi 0, %s163
      %s167 = sphi 0, %s166
      %s183 = sphi 0, %s167
      %s189 = sphi 0, %s191
      %s192 = sphi 0, %s189
      %s193 = sphi 0, %s192
      %s209 = sphi 0, %s193
      %s215 = sphi 0, %s217
      %s218 = sphi 0, %s215
      %s219 = sphi 0, %s218
      %s235 = sphi 0, %s219
    $region4: #{tpu_custom_call.1} parent=1 // loop_header_branch
      %26 = sbr.rel (%p24) target = $region8
    $region5: #{tpu_custom_call.1} parent=1 // loop_body
      %s28 = ssub.s32 %s23, 1
      %s29 = ssub.s32 %s23, 2
      %s30 = sadd.s32 %s23, 1
      %s31 = ssub.s32 %s23, %s30
      %p32 = scmp.eq.s32.totalorder %s31, 0
      %s34 = sadd.s32 %s33, 1
      %s35 = scalar_select %p32, %s33, %s34
      %p38 = pneg %p32
      %p39 = scmp.eq.s32.totalorder %s23, 1
      %p40 = por %p38, %p39
      %p41 = scmp.ne.s32.totalorder %s33, %s36
      %p42 = scmp.eq.s32.totalorder %s23, 0
      %p43 = por %p41, %p42
      %p44 = scmp.ne.s32.totalorder %s33, %s36
      %p45 = scmp.eq.s32.totalorder %s28, 1
      %p46 = por %p44, %p45
      %p47 = scmp.ne.s32.totalorder %s36, %s37
      %p48 = scmp.eq.s32.totalorder %s28, 0
      %p49 = por %p47, %p48
      %p50 = scmp.ne.s32.totalorder %s36, %s37
      %p51 = scmp.eq.s32.totalorder %s29, 1
      %p52 = por %p50, %p51
      %p54 = scmp.ne.s32.totalorder %s37, %s53
      %p55 = scmp.eq.s32.totalorder %s29, 0
      %p56 = por %p54, %p55
      %s57 = ssub.s32 %s23, %s30
      %p58 = scmp.eq.s32.totalorder %s57, 0
      %s60 = sadd.s32 %s59, 1
      %s61 = scalar_select %p58, %s59, %s60
      %p64 = pneg %p58
      %p65 = scmp.eq.s32.totalorder %s23, 1
      %p66 = por %p64, %p65
      %p67 = scmp.ne.s32.totalorder %s59, %s62
      %p68 = scmp.eq.s32.totalorder %s23, 0
      %p69 = por %p67, %p68
      %p70 = scmp.ne.s32.totalorder %s59, %s62
      %p71 = scmp.eq.s32.totalorder %s28, 1
      %p72 = por %p70, %p71
      %p73 = scmp.ne.s32.totalorder %s62, %s63
      %p74 = scmp.eq.s32.totalorder %s28, 0
      %p75 = por %p73, %p74
      %p76 = scmp.ne.s32.totalorder %s62, %s63
      %p77 = scmp.eq.s32.totalorder %s29, 1
      %p78 = por %p76, %p77
      %p80 = scmp.ne.s32.totalorder %s63, %s79
      %p81 = scmp.eq.s32.totalorder %s29, 0
      %p82 = por %p80, %p81
      %s83 = ssub.s32 %s23, %s30
      %p84 = scmp.eq.s32.totalorder %s83, 0
      %s86 = sadd.s32 %s85, 1
      %s87 = scalar_select %p84, %s85, %s86
      %p90 = pneg %p84
      %p91 = scmp.eq.s32.totalorder %s23, 1
      %p92 = por %p90, %p91
      %p93 = scmp.ne.s32.totalorder %s85, %s88
      %p94 = scmp.eq.s32.totalorder %s23, 0
      %p95 = por %p93, %p94
      %p96 = scmp.ne.s32.totalorder %s85, %s88
      %p97 = scmp.eq.s32.totalorder %s28, 1
      %p98 = por %p96, %p97
      %p99 = scmp.ne.s32.totalorder %s88, %s89
      %p100 = scmp.eq.s32.totalorder %s28, 0
      %p101 = por %p99, %p100
      %p102 = scmp.ne.s32.totalorder %s88, %s89
      %p103 = scmp.eq.s32.totalorder %s29, 1
      %p104 = por %p102, %p103
      %p106 = scmp.ne.s32.totalorder %s89, %s105
      %p107 = scmp.eq.s32.totalorder %s29, 0
      %p108 = por %p106, %p107
      %s109 = ssub.s32 %s23, %s30
      %p110 = scmp.eq.s32.totalorder %s109, 0
      %s112 = sadd.s32 %s111, 1
      %s113 = scalar_select %p110, %s111, %s112
      %p116 = pneg %p110
      %p117 = scmp.eq.s32.totalorder %s23, 1
      %p118 = por %p116, %p117
      %p119 = scmp.ne.s32.totalorder %s111, %s114
      %p120 = scmp.eq.s32.totalorder %s23, 0
      %p121 = por %p119, %p120
      %p122 = scmp.ne.s32.totalorder %s111, %s114
      %p123 = scmp.eq.s32.totalorder %s28, 1
      %p124 = por %p122, %p123
      %p125 = scmp.ne.s32.totalorder %s114, %s115
      %p126 = scmp.eq.s32.totalorder %s28, 0
      %p127 = por %p125, %p126
      %p128 = scmp.ne.s32.totalorder %s114, %s115
      %p129 = scmp.eq.s32.totalorder %s29, 1
      %p130 = por %p128, %p129
      %p132 = scmp.ne.s32.totalorder %s115, %s131
      %p133 = scmp.eq.s32.totalorder %s29, 0
      %p134 = por %p132, %p133
      %s135 = ssub.s32 %s23, %s30
      %p136 = scmp.eq.s32.totalorder %s135, 0
      %s138 = sadd.s32 %s137, 1
      %s139 = scalar_select %p136, %s137, %s138
      %p142 = pneg %p136
      %p143 = scmp.eq.s32.totalorder %s23, 1
      %p144 = por %p142, %p143
      %p145 = scmp.ne.s32.totalorder %s137, %s140
      %p146 = scmp.eq.s32.totalorder %s23, 0
      %p147 = por %p145, %p146
      %p148 = scmp.ne.s32.totalorder %s137, %s140
      %p149 = scmp.eq.s32.totalorder %s28, 1
      %p150 = por %p148, %p149
      %p151 = scmp.ne.s32.totalorder %s140, %s141
      %p152 = scmp.eq.s32.totalorder %s28, 0
      %p153 = por %p151, %p152
      %p154 = scmp.ne.s32.totalorder %s140, %s141
      %p155 = scmp.eq.s32.totalorder %s29, 1
      %p156 = por %p154, %p155
      %p158 = scmp.ne.s32.totalorder %s141, %s157
      %p159 = scmp.eq.s32.totalorder %s29, 0
      %p160 = por %p158, %p159
      %s161 = ssub.s32 %s23, %s30
      %p162 = scmp.eq.s32.totalorder %s161, 0
      %s164 = sadd.s32 %s163, 1
      %s165 = scalar_select %p162, %s163, %s164
      %p168 = pneg %p162
      %p169 = scmp.eq.s32.totalorder %s23, 1
      %p170 = por %p168, %p169
      %p171 = scmp.ne.s32.totalorder %s163, %s166
      %p172 = scmp.eq.s32.totalorder %s23, 0
      %p173 = por %p171, %p172
      %p174 = scmp.ne.s32.totalorder %s163, %s166
      %p175 = scmp.eq.s32.totalorder %s28, 1
      %p176 = por %p174, %p175
      %p177 = scmp.ne.s32.totalorder %s166, %s167
      %p178 = scmp.eq.s32.totalorder %s28, 0
      %p179 = por %p177, %p178
      %p180 = scmp.ne.s32.totalorder %s166, %s167
      %p181 = scmp.eq.s32.totalorder %s29, 1
      %p182 = por %p180, %p181
      %p184 = scmp.ne.s32.totalorder %s167, %s183
      %p185 = scmp.eq.s32.totalorder %s29, 0
      %p186 = por %p184, %p185
      %s187 = ssub.s32 %s23, %s30
      %p188 = scmp.eq.s32.totalorder %s187, 0
      %s190 = sadd.s32 %s189, 1
      %s191 = scalar_select %p188, %s189, %s190
      %p194 = pneg %p188
      %p195 = scmp.eq.s32.totalorder %s23, 1
      %p196 = por %p194, %p195
      %p197 = scmp.ne.s32.totalorder %s189, %s192
      %p198 = scmp.eq.s32.totalorder %s23, 0
      %p199 = por %p197, %p198
      %p200 = scmp.ne.s32.totalorder %s189, %s192
      %p201 = scmp.eq.s32.totalorder %s28, 1
      %p202 = por %p200, %p201
      %p203 = scmp.ne.s32.totalorder %s192, %s193
      %p204 = scmp.eq.s32.totalorder %s28, 0
      %p205 = por %p203, %p204
      %p206 = scmp.ne.s32.totalorder %s192, %s193
      %p207 = scmp.eq.s32.totalorder %s29, 1
      %p208 = por %p206, %p207
      %p210 = scmp.ne.s32.totalorder %s193, %s209
      %p211 = scmp.eq.s32.totalorder %s29, 0
      %p212 = por %p210, %p211
      %s213 = ssub.s32 %s23, %s30
      %p214 = scmp.eq.s32.totalorder %s213, 0
      %s216 = sadd.s32 %s215, 1
      %s217 = scalar_select %p214, %s215, %s216
      %p220 = pneg %p214
      %p221 = scmp.eq.s32.totalorder %s23, 1
      %p222 = por %p220, %p221
      %p223 = scmp.ne.s32.totalorder %s215, %s218
      %p224 = scmp.eq.s32.totalorder %s23, 0
      %p225 = por %p223, %p224
      %p226 = scmp.ne.s32.totalorder %s215, %s218
      %p227 = scmp.eq.s32.totalorder %s28, 1
      %p228 = por %p226, %p227
      %p229 = scmp.ne.s32.totalorder %s218, %s219
      %p230 = scmp.eq.s32.totalorder %s28, 0
      %p231 = por %p229, %p230
      %p232 = scmp.ne.s32.totalorder %s218, %s219
      %p233 = scmp.eq.s32.totalorder %s29, 1
      %p234 = por %p232, %p233
      %p236 = scmp.ne.s32.totalorder %s219, %s235
      %p237 = scmp.eq.s32.totalorder %s29, 0
      %p238 = por %p236, %p237
      %p239 = scmp.le.s32.totalorder 1, %s23
      %p240 = scmp.lt.s32.totalorder %s23, 3
      %p241 = pnand %p239, %p240
      %p242 = pneg %p241
      // Predicated region
      $region9: #{tpu_custom_call.1} parent=5 // pred_check
        _
      $region10: #{tpu_custom_call.1} parent=5 // pred_check_branch
        %244 = sbr.rel (%p241) target = $region12
      $region11: #{tpu_custom_call.1} parent=5 // pred_region
        %s245 = ssub.s32 %s23, 1
      $region12: #{tpu_custom_call.1} parent=5 // pred_fallthru
        _
      %p246 = scmp.lt.s32.totalorder %s23, 2
      // Predicated region
      $region13: #{tpu_custom_call.1} parent=5 // pred_check
        %p247 = pneg %p246
      $region14: #{tpu_custom_call.1} parent=5 // pred_check_branch
        %249 = sbr.rel (%p247) target = $region16
      $region15: #{tpu_custom_call.1} parent=5 // pred_region
        // Predicated region
        $region17: #{tpu_custom_call.1} parent=15 // pred_check
          %p250 = pneg %p43
        $region18: #{tpu_custom_call.1} parent=15 // pred_check_branch
          %252 = sbr.rel (%p250) target = $region20
        $region19: #{tpu_custom_call.1} parent=15 // pred_region
          %p253 = scmp.lt.s32.totalorder %s23, 1
          %s254 = scalar_select %p253, %s23, 1
          %s255 = smul.addr %s254, 4
          %s256 = scalar_lea.vmem %s0, %s255
        $region20: #{tpu_custom_call.1} parent=15 // pred_fallthru
          _
        // Predicated region
        $region21: #{tpu_custom_call.1} parent=15 // pred_check
          %p257 = pneg %p69
        $region22: #{tpu_custom_call.1} parent=15 // pred_check_branch
          %259 = sbr.rel (%p257) target = $region24
        $region23: #{tpu_custom_call.1} parent=15 // pred_region
          %p260 = scmp.lt.s32.totalorder %s23, 1
          %s261 = scalar_select %p260, %s23, 1
          %s262 = smul.addr %s261, 4
          %s263 = scalar_lea.vmem %s1, %s262
        $region24: #{tpu_custom_call.1} parent=15 // pred_fallthru
          _
        // Predicated region
        $region25: #{tpu_custom_call.1} parent=15 // pred_check
          %p264 = pneg %p95
        $region26: #{tpu_custom_call.1} parent=15 // pred_check_branch
          %266 = sbr.rel (%p264) target = $region28
        $region27: #{tpu_custom_call.1} parent=15 // pred_region
          %p267 = scmp.lt.s32.totalorder %s23, 1
          %s268 = scalar_select %p267, %s23, 1
          %s269 = smul.addr %s268, 4
          %s270 = scalar_lea.vmem %s2, %s269
        $region28: #{tpu_custom_call.1} parent=15 // pred_fallthru
          _
        // Predicated region
        $region29: #{tpu_custom_call.1} parent=15 // pred_check
          %p271 = pneg %p121
        $region30: #{tpu_custom_call.1} parent=15 // pred_check_branch
          %273 = sbr.rel (%p271) target = $region32
        $region31: #{tpu_custom_call.1} parent=15 // pred_region
          %p274 = scmp.lt.s32.totalorder %s23, 1
          %s275 = scalar_select %p274, %s23, 1
          %s276 = smul.addr %s275, 4
          %s277 = scalar_lea.vmem %s3, %s276
        $region32: #{tpu_custom_call.1} parent=15 // pred_fallthru
          _
      $region16: #{tpu_custom_call.1} parent=5 // pred_fallthru
        _
      %p278 = scmp.le.s32.totalorder 1, %s23
      %p279 = scmp.lt.s32.totalorder %s23, 3
      %p280 = pnand %p278, %p279
      %p281 = pneg %p280
      // Predicated region
      $region33: #{tpu_custom_call.1} parent=5 // pred_check
        _
      $region34: #{tpu_custom_call.1} parent=5 // pred_check_branch
        %283 = sbr.rel (%p280) target = $region36
      $region35: #{tpu_custom_call.1} parent=5 // pred_region
        %s284 = ssub.s32 %s23, 1
        %p285 = scmp.lt.s32.totalorder %s28, 1
        %s286 = scalar_select %p285, %s28, 1
        %s287 = smul.addr %s286, 4
        %s288 = scalar_lea.vmem %s0, %s287
        %p289 = pneg %p49
        %p290 = pneg %p46
        %p291 = scmp.lt.s32.totalorder %s28, 1
        %s292 = scalar_select %p291, %s28, 1
        %s293 = smul.addr %s292, 4
        %s294 = scalar_lea.vmem %s1, %s293
        %p295 = pneg %p75
        %p296 = pneg %p72
        %p297 = scmp.lt.s32.totalorder %s28, 1
        %s298 = scalar_select %p297, %s28, 1
        %s299 = smul.addr %s298, 4
        %s300 = scalar_lea.vmem %s2, %s299
        %p301 = pneg %p101
        %p302 = pneg %p98
        %p303 = scmp.lt.s32.totalorder %s28, 1
        %s304 = scalar_select %p303, %s28, 1
        %s305 = smul.addr %s304, 4
        %s306 = scalar_lea.vmem %s3, %s305
        %p307 = pneg %p127
        %p308 = pneg %p124
        %p309 = pneg %p153
        %p310 = pneg %p150
        %s311 = sand.u32 %s140, 1
        %s312 = scalar_lea.sflag [#allocation3], %s311
        %s313 = sand.u32 %s140, 1
        %s314 = scalar_lea.vmem [#allocation2], %s313
        %p315 = pneg %p179
        %p316 = pneg %p176
        %s317 = sand.u32 %s28, 1
        %s318 = scalar_lea.sflag [#allocation5], %s317
        %s319 = sand.u32 %s166, 1
        %s320 = scalar_lea.vmem [#allocation4], %s319
        %p321 = pneg %p205
        %p322 = pneg %p202
        %s323 = sand.u32 %s28, 1
        %s324 = scalar_lea.sflag [#allocation5], %s323
        %s325 = sand.u32 %s192, 1
        %s326 = scalar_lea.vmem [#allocation6], %s325
        %p327 = pneg %p231
        %p328 = pneg %p228
        %s329 = sand.u32 %s218, 1
        %s330 = scalar_lea.sflag [#allocation8], %s329
        %s331 = sand.u32 %s218, 1
        %s332 = scalar_lea.vmem [#allocation7], %s331
        %p333 = scmp.lt.s32.totalorder %s28, 1
        %s334 = scalar_select %p333, %s28, 1
        %s335 = smul.addr %s334, 4
        %s336 = scalar_lea.vmem %s0, %s335
        %p337 = scmp.lt.s32.totalorder %s28, 1
        %s338 = scalar_select %p337, %s28, 1
        %s339 = smul.addr %s338, 4
        %s340 = scalar_lea.vmem %s1, %s339
        %p341 = scmp.lt.s32.totalorder %s28, 1
        %s342 = scalar_select %p341, %s28, 1
        %s343 = smul.addr %s342, 4
        %s344 = scalar_lea.vmem %s2, %s343
        %p345 = scmp.lt.s32.totalorder %s28, 1
        %s346 = scalar_select %p345, %s28, 1
        %s347 = smul.addr %s346, 4
        %s348 = scalar_lea.vmem %s3, %s347
        %v349 = vld [vmem:[%s336] sm:$0x1]
        %v350 = vld [vmem:[%s336 + $0x1] sm:$0x1]
        %v351 = vld [vmem:[%s336 + $0x2] sm:$0x1]
        %v352 = vld [vmem:[%s336 + $0x3] sm:$0x1]
        %v353 = vsub.f32 %v351, %v349
        %v354 = vadd.f32 %v353, 1.0
        %v355 = vsub.f32 %v352, %v350
        %v356 = vadd.f32 %v355, 1.0
        %v357 = vmul.f32 %v354, %v356
        %vm358 = vcmp.eq.f32.partialorder %v354, 1.0
        %vm359 = vcmp.eq.f32.partialorder %v356, 1.0
        %vm360 = vmand %vm358, %vm359
        %v361 = vld [vmem:[%s344] sm:$0x7]
        %363 = vrot.lane.b32.xlu0 %v361, 2
        %v364 = vpop.permute.xlu0 %363
        %v366 = vsub.f32 %v361, %v364
        %v367 = vadd.f32 %v366, 1.0
        %369 = vrot.lane.b32.xlu0 %v367, 127
        %v370 = vpop.permute.xlu0 %369
        %v372 = vmul.f32 %v367, %v370
        %vm373 = vcmp.eq.f32.partialorder %v367, 1.0
        %v374 = vsel %vm373, 1, 0
        %375 = vrot.lane.b32.xlu0 %v374, 127
        %v376 = vpop.permute.xlu0 %375
        %vm377 = vcmp.ne.s32.totalorder %v376, 0
        %vm378 = vmand %vm373, %vm377
        %v379 = vlaneseq
        %v380 = vshrl.u32 %v379, 7
        %v381 = vsub.s32 0, %v380
        %v382 = vrot.slane %v351, %v381
        %383 = vset.pattern.permute.xlu0 2
        %384 = vperm.xlu0 %383, %v361
        %v385 = vpop.permute.xlu0 %384
        %v387 = vmin.f32 %v382, %v385
        %v388 = vlaneseq
        %v389 = vshrl.u32 %v388, 7
        %v390 = vsub.s32 0, %v389
        %v391 = vrot.slane %v349, %v390
        %392 = vset.pattern.permute.xlu0 0
        %393 = vperm.xlu0 %392, %v361
        %v394 = vpop.permute.xlu0 %393
        %v396 = vmax.f32 %v391, %v394
        %v397 = vsub.f32 %v387, %v396
        %v398 = vadd.f32 %v397, 1.0
        %v399 = vmax.f32 %v398, 0.0
        %v400 = vlaneseq
        %v401 = vshrl.u32 %v400, 7
        %v402 = vsub.s32 0, %v401
        %v403 = vrot.slane %v352, %v402
        %404 = vset.pattern.permute.xlu0 3
        %405 = vperm.xlu0 %404, %v361
        %v406 = vpop.permute.xlu0 %405
        %v408 = vmin.f32 %v403, %v406
        %v409 = vlaneseq
        %v410 = vshrl.u32 %v409, 7
        %v411 = vsub.s32 0, %v410
        %v412 = vrot.slane %v350, %v411
        %413 = vset.pattern.permute.xlu0 1
        %414 = vperm.xlu0 %413, %v361
        %v415 = vpop.permute.xlu0 %414
        %v417 = vmax.f32 %v412, %v415
        %v418 = vsub.f32 %v408, %v417
        %v419 = vadd.f32 %v418, 1.0
        %v420 = vmax.f32 %v419, 0.0
        %v421 = vmul.f32 %v399, %v420
        %v422 = vlaneseq
        %v423 = vshrl.u32 %v422, 7
        %v424 = vsub.s32 0, %v423
        %v425 = vrot.slane %v357, %v424
        %427 = vset.pattern.permute.xlu0 2
        %428 = vperm.xlu0 %427, %v372
        %v429 = vpop.permute.xlu0 %428
        %v431 = vadd.f32 %v425, %v429
        %v432 = vsub.f32 %v431, %v421
        %v433 = vrcp.pop %v432
        %v434 = vmul.f32 %v421, %v433
        %v435 = vsel %vm378, 1, 0
        %436 = vset.pattern.permute.xlu0 2
        %437 = vperm.xlu0 %436, %v435
        %v438 = vpop.permute.xlu0 %437
        %vm439 = vcmp.eq.s32.totalorder %v438, 1
        %v440 = vsel %vm439, 0.0, %v434
        %v441 = vsel %vm360, 1, 0
        %v442 = vlaneseq
        %v443 = vshrl.u32 %v442, 7
        %v444 = vsub.s32 0, %v443
        %v445 = vrot.slane %v441, %v444
        %vm446 = vcmp.eq.s32.totalorder %v445, 1
        %v447 = vsel %vm446, -1.0, %v440
        %vm448 = vcmask 182272
        %v449 = vsel %vm448, %v447, -inf
        %v450 = vrot.slane %v449, 4
        %v451 = vmax.f32 %v449, %v450
        %v452 = vrot.slane %v451, 2
        %v453 = vmax.f32 %v451, %v452
        %v454 = vrot.slane %v453, 1
        %v455 = vmax.f32 %v453, %v454
        %v456 = vlaneseq
        %v457 = vshrl.u32 %v456, 7
        %vm458 = vcmp.eq.f32.partialorder %v447, %v455
        %v459 = vsel %vm458, %v457, 3
        %v460 = vsel %vm448, %v459, 2147483647
        %v461 = vrot.slane %v460, 4
        %vm462 = vcmp.lt.s32.totalorder %v460, %v461
        %v463 = vsel %vm462, %v460, %v461
        %v464 = vrot.slane %v463, 2
        %vm465 = vcmp.lt.s32.totalorder %v463, %v464
        %v466 = vsel %vm465, %v463, %v464
        %v467 = vrot.slane %v466, 1
        %vm468 = vcmp.lt.s32.totalorder %v466, %v467
        %v469 = vsel %vm468, %v466, %v467
        %vm470 = vcmask 180224
        %471 = vst.msk [vmem:[%s314] sm:$0x1] %vm470, %v455
        %472 = vst.msk [vmem:[%s320] sm:$0x1] %vm470, %v469
        %v473 = vld [vmem:[%s340] sm:$0x1]
        %v474 = vld [vmem:[%s340 + $0x1] sm:$0x1]
        %v475 = vld [vmem:[%s340 + $0x2] sm:$0x1]
        %v476 = vld [vmem:[%s340 + $0x3] sm:$0x1]
        %v477 = vsub.f32 %v475, %v473
        %v478 = vadd.f32 %v477, 1.0
        %v479 = vsub.f32 %v476, %v474
        %v480 = vadd.f32 %v479, 1.0
        %v481 = vmul.f32 %v478, %v480
        %vm482 = vcmp.eq.f32.partialorder %v478, 1.0
        %vm483 = vcmp.eq.f32.partialorder %v480, 1.0
        %vm484 = vmand %vm482, %vm483
        %v485 = vld [vmem:[%s348] sm:$0x7]
        %487 = vrot.lane.b32.xlu0 %v485, 2
        %v488 = vpop.permute.xlu0 %487
        %v490 = vsub.f32 %v485, %v488
        %v491 = vadd.f32 %v490, 1.0
        %493 = vrot.lane.b32.xlu0 %v491, 127
        %v494 = vpop.permute.xlu0 %493
        %v496 = vmul.f32 %v491, %v494
        %vm497 = vcmp.eq.f32.partialorder %v491, 1.0
        %v498 = vsel %vm497, 1, 0
        %499 = vrot.lane.b32.xlu0 %v498, 127
        %v500 = vpop.permute.xlu0 %499
        %vm501 = vcmp.ne.s32.totalorder %v500, 0
        %vm502 = vmand %vm497, %vm501
        %v503 = vlaneseq
        %v504 = vshrl.u32 %v503, 7
        %v505 = vsub.s32 0, %v504
        %v506 = vrot.slane %v475, %v505
        %507 = vset.pattern.permute.xlu0 2
        %508 = vperm.xlu0 %507, %v485
        %v509 = vpop.permute.xlu0 %508
        %v511 = vmin.f32 %v506, %v509
        %v512 = vlaneseq
        %v513 = vshrl.u32 %v512, 7
        %v514 = vsub.s32 0, %v513
        %v515 = vrot.slane %v473, %v514
        %516 = vset.pattern.permute.xlu0 0
        %517 = vperm.xlu0 %516, %v485
        %v518 = vpop.permute.xlu0 %517
        %v520 = vmax.f32 %v515, %v518
        %v521 = vsub.f32 %v511, %v520
        %v522 = vadd.f32 %v521, 1.0
        %v523 = vmax.f32 %v522, 0.0
        %v524 = vlaneseq
        %v525 = vshrl.u32 %v524, 7
        %v526 = vsub.s32 0, %v525
        %v527 = vrot.slane %v476, %v526
        %528 = vset.pattern.permute.xlu0 3
        %529 = vperm.xlu0 %528, %v485
        %v530 = vpop.permute.xlu0 %529
        %v532 = vmin.f32 %v527, %v530
        %v533 = vlaneseq
        %v534 = vshrl.u32 %v533, 7
        %v535 = vsub.s32 0, %v534
        %v536 = vrot.slane %v474, %v535
        %537 = vset.pattern.permute.xlu0 1
        %538 = vperm.xlu0 %537, %v485
        %v539 = vpop.permute.xlu0 %538
        %v541 = vmax.f32 %v536, %v539
        %v542 = vsub.f32 %v532, %v541
        %v543 = vadd.f32 %v542, 1.0
        %v544 = vmax.f32 %v543, 0.0
        %v545 = vmul.f32 %v523, %v544
        %v546 = vlaneseq
        %v547 = vshrl.u32 %v546, 7
        %v548 = vsub.s32 0, %v547
        %v549 = vrot.slane %v481, %v548
        %551 = vset.pattern.permute.xlu0 2
        %552 = vperm.xlu0 %551, %v496
        %v553 = vpop.permute.xlu0 %552
        %v555 = vadd.f32 %v549, %v553
        %v556 = vsub.f32 %v555, %v545
        %v557 = vrcp.pop %v556
        %v558 = vmul.f32 %v545, %v557
        %v559 = vsel %vm502, 1, 0
        %560 = vset.pattern.permute.xlu0 2
        %561 = vperm.xlu0 %560, %v559
        %v562 = vpop.permute.xlu0 %561
        %vm563 = vcmp.eq.s32.totalorder %v562, 1
        %v564 = vsel %vm563, 0.0, %v558
        %v565 = vsel %vm484, 1, 0
        %v566 = vlaneseq
        %v567 = vshrl.u32 %v566, 7
        %v568 = vsub.s32 0, %v567
        %v569 = vrot.slane %v565, %v568
        %vm570 = vcmp.eq.s32.totalorder %v569, 1
        %v571 = vsel %vm570, -1.0, %v564
        %v572 = vsel %vm448, %v571, -inf
        %v573 = vrot.slane %v572, 4
        %v574 = vmax.f32 %v572, %v573
        %v575 = vrot.slane %v574, 2
        %v576 = vmax.f32 %v574, %v575
        %v577 = vrot.slane %v576, 1
        %v578 = vmax.f32 %v576, %v577
        %vm579 = vcmp.eq.f32.partialorder %v571, %v578
        %v580 = vsel %vm579, %v457, 3
        %v581 = vsel %vm448, %v580, 2147483647
        %v582 = vrot.slane %v581, 4
        %vm583 = vcmp.lt.s32.totalorder %v581, %v582
        %v584 = vsel %vm583, %v581, %v582
        %v585 = vrot.slane %v584, 2
        %vm586 = vcmp.lt.s32.totalorder %v584, %v585
        %v587 = vsel %vm586, %v584, %v585
        %v588 = vrot.slane %v587, 1
        %vm589 = vcmp.lt.s32.totalorder %v587, %v588
        %v590 = vsel %vm589, %v587, %v588
        %591 = vst.msk [vmem:[%s326] sm:$0x1] %vm470, %v578
        %592 = vst.msk [vmem:[%s332] sm:$0x1] %vm470, %v590
        %s593 = sand.u32 %s140, 1
        %s594 = scalar_lea.sflag [#allocation3], %s593
        %s595 = sand.u32 %s140, 1
        %s596 = scalar_lea.vmem [#allocation2], %s595
        %s597 = sand.u32 %s28, 1
        %s598 = scalar_lea.sflag [#allocation5], %s597
        %s599 = sand.u32 %s166, 1
        %s600 = scalar_lea.vmem [#allocation4], %s599
        %s601 = sand.u32 %s28, 1
        %s602 = scalar_lea.sflag [#allocation5], %s601
        %s603 = sand.u32 %s192, 1
        %s604 = scalar_lea.vmem [#allocation6], %s603
        %s605 = sand.u32 %s218, 1
        %s606 = scalar_lea.sflag [#allocation8], %s605
        %s607 = sand.u32 %s218, 1
        %s608 = scalar_lea.vmem [#allocation7], %s607
        // Predicated region
        $region37: #{tpu_custom_call.1} parent=35 // pred_check
          %p609 = pneg %p150
        $region38: #{tpu_custom_call.1} parent=35 // pred_check_branch
          %611 = sbr.rel (%p609) target = $region40
        $region39: #{tpu_custom_call.1} parent=35 // pred_region
          %s613 = ssub.s32 16, 16
          %614 = vsyncadd %s594, %s613
          %s615 = smul.addr %s28, 16
          %s616 = scalar_lea.hbm %s4, %s615
          %s618 = sshll.u32 %s596, 4
          %s619 = int_to_ptr.vmem [resolvable:$true] %s618
          %621 = dma.vmem_to_hbm [thread:$0]  %s619, 16, %s616, %s594
        $region40: #{tpu_custom_call.1} parent=35 // pred_fallthru
          _
        // Predicated region
        $region41: #{tpu_custom_call.1} parent=35 // pred_check
          %p622 = pneg %p176
        $region42: #{tpu_custom_call.1} parent=35 // pred_check_branch
          %624 = sbr.rel (%p622) target = $region44
        $region43: #{tpu_custom_call.1} parent=35 // pred_region
          %s626 = ssub.s32 16, 16
          %627 = vsyncadd %s598, %s626
          %s628 = smul.addr %s28, 16
          %s629 = scalar_lea.hbm %s5, %s628
          %s631 = sshll.u32 %s600, 4
          %s632 = int_to_ptr.vmem [resolvable:$true] %s631
          %634 = dma.vmem_to_hbm [thread:$0]  %s632, 16, %s629, %s598
        $region44: #{tpu_custom_call.1} parent=35 // pred_fallthru
          _
        // Predicated region
        $region45: #{tpu_custom_call.1} parent=35 // pred_check
          %p635 = pneg %p202
        $region46: #{tpu_custom_call.1} parent=35 // pred_check_branch
          %637 = sbr.rel (%p635) target = $region48
        $region47: #{tpu_custom_call.1} parent=35 // pred_region
          %s639 = ssub.s32 16, 16
          %640 = vsyncadd %s602, %s639
          %s641 = smul.addr %s28, 16
          %s642 = scalar_lea.hbm %s6, %s641
          %s644 = sshll.u32 %s604, 4
          %s645 = int_to_ptr.vmem [resolvable:$true] %s644
          %647 = dma.vmem_to_hbm [thread:$0]  %s645, 16, %s642, %s602
        $region48: #{tpu_custom_call.1} parent=35 // pred_fallthru
          _
        // Predicated region
        $region49: #{tpu_custom_call.1} parent=35 // pred_check
          %p648 = pneg %p228
        $region50: #{tpu_custom_call.1} parent=35 // pred_check_branch
          %650 = sbr.rel (%p648) target = $region52
        $region51: #{tpu_custom_call.1} parent=35 // pred_region
          %s652 = ssub.s32 16, 16
          %653 = vsyncadd %s606, %s652
          %s654 = smul.addr %s28, 16
          %s655 = scalar_lea.hbm %s7, %s654
          %s657 = sshll.u32 %s608, 4
          %s658 = int_to_ptr.vmem [resolvable:$true] %s657
          %660 = dma.vmem_to_hbm [thread:$0]  %s658, 16, %s655, %s606
        $region52: #{tpu_custom_call.1} parent=35 // pred_fallthru
          _
      $region36: #{tpu_custom_call.1} parent=5 // pred_fallthru
        _
      %p661 = scmp.le.s32.totalorder 2, %s23
      // Predicated region
      $region53: #{tpu_custom_call.1} parent=5 // pred_check
        %p662 = pneg %p661
      $region54: #{tpu_custom_call.1} parent=5 // pred_check_branch
        %664 = sbr.rel (%p662) target = $region56
      $region55: #{tpu_custom_call.1} parent=5 // pred_region
        %s665 = ssub.s32 %s23, 2
        // Predicated region
        $region57: #{tpu_custom_call.1} parent=55 // pred_check
          %p666 = pneg %p156
        $region58: #{tpu_custom_call.1} parent=55 // pred_check_branch
          %668 = sbr.rel (%p666) target = $region60
        $region59: #{tpu_custom_call.1} parent=55 // pred_region
          %s669 = sand.u32 %s141, 1
          %s670 = scalar_lea.sflag [#allocation3], %s669
          %s671 = sand.u32 %s141, 1
          %s672 = scalar_lea.vmem [#allocation2], %s671
          %673 = dma.done %s670, 16
        $region60: #{tpu_custom_call.1} parent=55 // pred_fallthru
          _
        // Predicated region
        $region61: #{tpu_custom_call.1} parent=55 // pred_check
          %p674 = pneg %p182
        $region62: #{tpu_custom_call.1} parent=55 // pred_check_branch
          %676 = sbr.rel (%p674) target = $region64
        $region63: #{tpu_custom_call.1} parent=55 // pred_region
          %s677 = sand.u32 %s29, 1
          %s678 = scalar_lea.sflag [#allocation5], %s677
          %s679 = sand.u32 %s167, 1
          %s680 = scalar_lea.vmem [#allocation4], %s679
          %681 = dma.done %s678, 16
        $region64: #{tpu_custom_call.1} parent=55 // pred_fallthru
          _
        // Predicated region
        $region65: #{tpu_custom_call.1} parent=55 // pred_check
          %p682 = pneg %p208
        $region66: #{tpu_custom_call.1} parent=55 // pred_check_branch
          %684 = sbr.rel (%p682) target = $region68
        $region67: #{tpu_custom_call.1} parent=55 // pred_region
          %s685 = sand.u32 %s29, 1
          %s686 = scalar_lea.sflag [#allocation5], %s685
          %s687 = sand.u32 %s193, 1
          %s688 = scalar_lea.vmem [#allocation6], %s687
          %689 = dma.done %s686, 16
        $region68: #{tpu_custom_call.1} parent=55 // pred_fallthru
          _
        // Predicated region
        $region69: #{tpu_custom_call.1} parent=55 // pred_check
          %p690 = pneg %p234
        $region70: #{tpu_custom_call.1} parent=55 // pred_check_branch
          %692 = sbr.rel (%p690) target = $region72
        $region71: #{tpu_custom_call.1} parent=55 // pred_region
          %s693 = sand.u32 %s219, 1
          %s694 = scalar_lea.sflag [#allocation8], %s693
          %s695 = sand.u32 %s219, 1
          %s696 = scalar_lea.vmem [#allocation7], %s695
          %697 = dma.done %s694, 16
        $region72: #{tpu_custom_call.1} parent=55 // pred_fallthru
          _
      $region56: #{tpu_custom_call.1} parent=5 // pred_fallthru
        _
    $region6: #{tpu_custom_call.1} parent=1 // loop_footer
      %s27 = sadd.s32 1, %s23
    $region7: #{tpu_custom_call.1} parent=1 // loop_footer_branch
      %22 = sbr.rel target = $region3
    $region8: #{tpu_custom_call.1} parent=1 // loop_exit
      _
    %698 = vsyncpa [#allocation3], 1
    %s699 = scalar_lea.sflag [#allocation3], 1
    %700 = vsyncpa %s699, 1
    %701 = vsyncpa [#allocation5], 1
    %s702 = scalar_lea.sflag [#allocation5], 1
    %703 = vsyncpa %s702, 1
    %704 = vsyncpa [#allocation8], 1
    %s705 = scalar_lea.sflag [#allocation8], 1
    %706 = vsyncpa %s705, 1

</llo_original>
